<compile_context>
chip_gen: v6e
topology: v6e:2x2x1
jax: 0.10.0
libtpu: 0.0.40
codegen_flags: <defaults>
</compile_context>

<pallas_src>
import jax
import jax.numpy as jnp
from jax.experimental import pallas as pl
from jax.experimental.pallas import tpu as pltpu


def _round_up(n, m):
    return ((n + m - 1) // m) * m


def _swiglu_mlp_kernel(x_ref, w12_ref, w3_ref, o_ref):
    # x_ref  : (tm, C)    bf16 tile of flattened tokens
    # w12_ref: (C, 2H)    fused [c_fc | c_fc2] weight, (in, out) layout
    # w3_ref : (H, C)     c_proj weight, (in, out) layout
    # o_ref  : (tm, C)
    hdim = w3_ref.shape[0]
    x = x_ref[...]
    # Single MXU pass for both fc projections; accumulate in f32.
    h12 = jnp.dot(x, w12_ref[...], preferred_element_type=jnp.float32)
    h1 = h12[:, :hdim]
    h2 = h12[:, hdim:]
    # SiLU gate in f32 (VPU mul + EUP sigmoid ride their own VLIW slots and
    # hide under the matmuls); cast to the matmul dtype only for the 2nd dot.
    gated = h1 * (h2 * jax.nn.sigmoid(h2))
    o_ref[...] = jnp.dot(gated.astype(w3_ref.dtype), w3_ref[...],
                         preferred_element_type=jnp.float32).astype(o_ref.dtype)


def prepare_swiglu_weights(w_fc, w_fc2, w_proj, dtype=jnp.bfloat16):
    """One-time (outside the hot path) fuse / transpose / cast of the
    PyTorch-layout (out, in) weights into kernel layout.

    Returns:
      w12: (C, 2H) fused [c_fc | c_fc2] in (in, out) layout
      w3 : (H, C)  c_proj in (in, out) layout
    """
    w12 = jnp.concatenate([w_fc, w_fc2], axis=0).T.astype(dtype)   # (C, 2H)
    w3 = w_proj.T.astype(dtype)                                    # (H, C)
    return w12, w3


def swiglu_mlp(x, w12, w3, *, tm=256):
    """x: (B, T, C).  w12: (C, 2H), w3: (H, C) from prepare_swiglu_weights."""
    B, T, C = x.shape
    C2, H2 = w12.shape
    H = H2 // 2
    assert C2 == C and w3.shape == (H, C)
    M = B * T

    # Token-tile size: big (default 256) for MXU utilization, multiple of 16
    # for bf16 sublane packing; pad M up so any B*T works.
    tm_eff = min(tm, _round_up(M, 16))
    Mp = _round_up(M, tm_eff)
    grid_m = Mp // tm_eff

    xf = x.reshape(M, C).astype(w12.dtype)
    if Mp != M:
        xf = jnp.pad(xf, ((0, Mp - M), (0, 0)))

    itemsize = jnp.dtype(w12.dtype).itemsize
    cost = pl.CostEstimate(
        flops=2 * Mp * (C * H2 + H * C),
        transcendentals=Mp * H,                         # sigmoid in the gate
        bytes_accessed=(Mp * C + C * H2 + H * C) * itemsize
                       + Mp * C * jnp.dtype(x.dtype).itemsize,
    )

    out = pl.pallas_call(
        _swiglu_mlp_kernel,
        out_shape=jax.ShapeDtypeStruct((Mp, C), x.dtype),
        grid_spec=pltpu.PrefetchScalarGridSpec(
            num_scalar_prefetch=0,
            grid=(grid_m,),
            in_specs=[
                pl.BlockSpec((tm_eff, C), lambda i: (i, 0)),   # token tile
                # Constant index_map -> weights DMA'd once, resident across
                # the whole grid.
                pl.BlockSpec((C, H2), lambda i: (0, 0)),
                pl.BlockSpec((H, C), lambda i: (0, 0)),
            ],
            out_specs=pl.BlockSpec((tm_eff, C), lambda i: (i, 0)),
        ),
        compiler_params=pltpu.CompilerParams(
            dimension_semantics=("parallel",),    # shard M axis across TCs
            vmem_limit_bytes=64 * 1024 * 1024,
        ),
        cost_estimate=cost,
    )(xf, w12, w3)

    if Mp != M:
        out = out[:M]
    return out.reshape(B, T, C)


def _hidden_dim(n_embd, multiple_of=128, ffn_dim_multiplier=None):
    hidden = 4 * n_embd
    hidden = int(2 * hidden / 3)
    if ffn_dim_multiplier is not None:
        hidden = int(ffn_dim_multiplier * hidden)
    return multiple_of * ((hidden + multiple_of - 1) // multiple_of)


if __name__ == "__main__":
    # Small config consistent with the module: n_embd=128, multiple_of=128,
    # ffn_dim_multiplier=None -> hidden_dim = 384.
    B, T, C = 2, 8, 128
    H = _hidden_dim(C)

    key = jax.random.PRNGKey(0)
    kx, k1, k2, k3 = jax.random.split(key, 4)
    x = jax.random.normal(kx, (B, T, C), dtype=jnp.float32)
    # PyTorch nn.Linear stores (out, in); default-init-like scale.
    w_fc = jax.random.uniform(k1, (H, C), jnp.float32, -1.0, 1.0) / jnp.sqrt(C)
    w_fc2 = jax.random.uniform(k2, (H, C), jnp.float32, -1.0, 1.0) / jnp.sqrt(C)
    w_proj = jax.random.uniform(k3, (C, H), jnp.float32, -1.0, 1.0) / jnp.sqrt(H)

    # One-time weight prep (fuse + transpose + bf16 cast), then run the kernel.
    w12, w3 = prepare_swiglu_weights(w_fc, w_fc2, w_proj)
    y = swiglu_mlp(x, w12, w3)
    jax.block_until_ready(y)
    assert y.shape == x.shape and y.dtype == x.dtype

    # Reference at matched precision (bf16 inputs, f32 accumulation).
    f32 = jnp.float32
    xb = x.astype(jnp.bfloat16).astype(f32)
    w1b = w_fc.astype(jnp.bfloat16).astype(f32)
    w2b = w_fc2.astype(jnp.bfloat16).astype(f32)
    w3b = w_proj.astype(jnp.bfloat16).astype(f32)
    x1 = xb @ w1b.T
    x2 = xb @ w2b.T
    h = (x1 * (x2 * jax.nn.sigmoid(x2))).astype(jnp.bfloat16).astype(f32)
    y_ref = h @ w3b.T
    assert jnp.allclose(y, y_ref, atol=2e-2, rtol=2e-2), "mismatch vs mixed-precision reference"

    # Coarse sanity check against the pure-f32 PyTorch forward.
    x1f = x @ w_fc.T
    x2f = x @ w_fc2.T
    y_f32 = (x1f * (x2f * jax.nn.sigmoid(x2f))) @ w_proj.T
    assert jnp.allclose(y, y_f32, atol=1e-1, rtol=1e-1), "mismatch vs f32 reference"

    print("KERNEL_OK")
</pallas_src>

<mosaic_0001>
module attributes {stable_mosaic.version = 11 : i64} {
  func.func @_swiglu_mlp_kernel(%arg0: i32, %arg1: memref<16x128xbf16, #tpu.memory_space<vmem>>, %arg2: memref<128x768xbf16, #tpu.memory_space<vmem>>, %arg3: memref<384x128xbf16, #tpu.memory_space<vmem>>, %arg4: memref<16x128xf32, #tpu.memory_space<vmem>>) attributes {dimension_semantics = [#tpu.dimension_semantics<parallel>], iteration_bounds = array<i64: 1>, scalar_prefetch = 0 : i64, scratch_operands = 0 : i64, tpu.core_type = #tpu.core_type<tc>, window_params = [{transform_indices = @transform_0, window_bounds = array<i64: 16, 128>}, {pipeline_mode = #tpu.pipeline_mode<synchronous>, transform_indices = @transform_1, window_bounds = array<i64: 128, 768>}, {pipeline_mode = #tpu.pipeline_mode<synchronous>, transform_indices = @transform_2, window_bounds = array<i64: 384, 128>}, {transform_indices = @transform_3, window_bounds = array<i64: 16, 128>}]} {
    %c0 = arith.constant 0 : index
    %c0_0 = arith.constant 0 : index
    %0 = vector.load %arg1[%c0, %c0_0] : memref<16x128xbf16, #tpu.memory_space<vmem>>, vector<16x128xbf16>
    %c0_1 = arith.constant 0 : index
    %c0_2 = arith.constant 0 : index
    %1 = vector.load %arg2[%c0_1, %c0_2] : memref<128x768xbf16, #tpu.memory_space<vmem>>, vector<128x768xbf16>
    %cst = arith.constant dense<0.000000e+00> : vector<16x768xf32>
    %2 = tpu.matmul %0, %1, %cst {dimension_numbers = #tpu.dot_dimension_numbers<[1], [0], [0], [1], [0, 0, 1, 1], [], []>} : vector<16x128xbf16>, vector<128x768xbf16>, vector<16x768xf32> -> vector<16x768xf32>
    %3 = vector.extract_strided_slice %2 {offsets = [0, 0], sizes = [16, 384], strides = [1, 1]} : vector<16x768xf32> to vector<16x384xf32>
    %4 = vector.extract_strided_slice %2 {offsets = [0, 384], sizes = [16, 384], strides = [1, 1]} : vector<16x768xf32> to vector<16x384xf32>
    %5 = arith.negf %4 : vector<16x384xf32>
    %6 = math.exp %5 : vector<16x384xf32>
    %cst_3 = arith.constant 1.000000e+00 : f32
    %7 = vector.broadcast %cst_3 : f32 to vector<16x384xf32>
    %8 = arith.addf %7, %6 : vector<16x384xf32>
    %9 = arith.divf %7, %8 : vector<16x384xf32>
    %10 = arith.mulf %4, %9 : vector<16x384xf32>
    %11 = arith.mulf %3, %10 : vector<16x384xf32>
    %12 = arith.truncf %11 : vector<16x384xf32> to vector<16x384xbf16>
    %c0_4 = arith.constant 0 : index
    %c0_5 = arith.constant 0 : index
    %13 = vector.load %arg3[%c0_4, %c0_5] : memref<384x128xbf16, #tpu.memory_space<vmem>>, vector<384x128xbf16>
    %cst_6 = arith.constant dense<0.000000e+00> : vector<16x128xf32>
    %14 = tpu.matmul %12, %13, %cst_6 {dimension_numbers = #tpu.dot_dimension_numbers<[1], [0], [0], [1], [0, 0, 1, 1], [], []>} : vector<16x384xbf16>, vector<384x128xbf16>, vector<16x128xf32> -> vector<16x128xf32>
    %c0_7 = arith.constant 0 : index
    %c0_8 = arith.constant 0 : index
    %15 = vector.load %arg4[%c0_7, %c0_8] : memref<16x128xf32, #tpu.memory_space<vmem>>, vector<16x128xf32>
    tpu.vector_store %arg4[%c0_7, %c0_8], %14 {strides = array<i32>} : memref<16x128xf32, #tpu.memory_space<vmem>>, vector<16x128xf32>,
    return
  }
  func.func @transform_0(%arg0: i32) -> (i32, i32) {
    %c0_i32 = arith.constant 0 : i32
    %c0_i32_0 = arith.constant 0 : i32
    return %arg0, %c0_i32 : i32, i32
  }
  func.func @transform_1(%arg0: i32) -> (i32, i32) {
    %c0_i32 = arith.constant 0 : i32
    %c0_i32_0 = arith.constant 0 : i32
    %c0_i32_1 = arith.constant 0 : i32
    return %c0_i32, %c0_i32_0 : i32, i32
  }
  func.func @transform_2(%arg0: i32) -> (i32, i32) {
    %c0_i32 = arith.constant 0 : i32
    %c0_i32_0 = arith.constant 0 : i32
    %c0_i32_1 = arith.constant 0 : i32
    return %c0_i32, %c0_i32_0 : i32, i32
  }
  func.func @transform_3(%arg0: i32) -> (i32, i32) {
    %c0_i32 = arith.constant 0 : i32
    %c0_i32_0 = arith.constant 0 : i32
    return %arg0, %c0_i32 : i32, i32
  }
}

</mosaic_0001>

<llo_original>
// kernel: tpu_custom_call.1
$region0: #{tpu_custom_call.1}
  #allocation0 [shape = 'u32[]', space=smem, size = 0x4, offset = 0x4, fixed_abs, tag = 'smem constant byte address 0x4 - core index']
  #allocation1 [shape = 'u32[144,128]{1,0:T(1,128)}', space=vmem, size = 0x12000, scoped, tag = 'internal scratch']
  %s0 = inlined_call_operand.hbm [shape: bf16[16,128], index: 0, kind: input, shape index: {}]
  %s1 = inlined_call_operand.hbm [shape: bf16[128,768], index: 1, kind: input, shape index: {}]
  %s2 = inlined_call_operand.hbm [shape: bf16[384,128], index: 2, kind: input, shape index: {}]
  %s3 = inlined_call_operand.hbm [shape: f32[16,128], index: 3, kind: output, shape index: {}]
  %s4 = sld [smem:[#allocation0]]
  $region34: #{tpu_custom_call.1} parent=0
    _
  %s6 = ssub.s32 1, %s4
  %s7 = scalar_select 0, %s6, %s4
  $region1: #{tpu_custom_call.1} parent=0
    #allocation2 [shape = 'u8[4096]{0}', space=vmem, size = 0x1000, scoped, tag = 'input window, operand 0, single buffered']
    #allocation3 [shape = 's32[1]{0}', space=sflag, size = 0x4, scoped, tag = 'scoped memory for tpu_custom_call.1']
    #allocation4 [shape = 's32[1]{0}', space=sflag, size = 0x4, scoped, tag = 'scoped memory for tpu_custom_call.1']
    #allocation5 [shape = 'u8[196608]{0}', space=vmem, size = 0x30000, scoped, tag = 'input window, operand 1, single buffered']
    #allocation6 [shape = 's32[1]{0}', space=sflag, size = 0x4, scoped, tag = 'scoped memory for tpu_custom_call.1']
    #allocation7 [shape = 'u8[98304]{0}', space=vmem, size = 0x18000, scoped, tag = 'input window, operand 2, single buffered']
    #allocation8 [shape = 'u8[8192]{0}', space=vmem, size = 0x2000, scoped, tag = 'output window, operand 0, single buffered']
    %8 = vsyncpa [#allocation3], 0
    %9 = vsyncpa [#allocation6], 0
    %10 = vsyncpa [#allocation4], 0
    // Predicated region
    $region2: #{tpu_custom_call.1} parent=1 // pred_check
      _
    $region3: #{tpu_custom_call.1} parent=1 // pred_check_branch
      %12 = sbr.rel (0) target = $region5
    $region4: #{tpu_custom_call.1} parent=1 // pred_region
      %s14 = ssub.s32 128, 128
      %15 = vsyncadd [#allocation3], %s14
      %s16 = sshll.u32 [#allocation2], 4
      %s17 = int_to_ptr.vmem [resolvable:$true] %s16
      %22 = dma.hbm_to_vmem [thread:$0]  %s0, 128, %s17, [#allocation3], 64, 64, 4
    $region5: #{tpu_custom_call.1} parent=1 // pred_fallthru
      _
    // Predicated region
    $region6: #{tpu_custom_call.1} parent=1 // pred_check
      _
    $region7: #{tpu_custom_call.1} parent=1 // pred_check_branch
      %24 = sbr.rel (0) target = $region9
    $region8: #{tpu_custom_call.1} parent=1 // pred_region
      %s26 = ssub.s32 6144, 6144
      %27 = vsyncadd [#allocation6], %s26
      %s28 = sshll.u32 [#allocation5], 4
      %s29 = int_to_ptr.vmem [resolvable:$true] %s28
      %34 = dma.hbm_to_vmem [thread:$0]  %s1, 6144, %s29, [#allocation6], 384, 384, 24
    $region9: #{tpu_custom_call.1} parent=1 // pred_fallthru
      _
    // Predicated region
    $region10: #{tpu_custom_call.1} parent=1 // pred_check
      _
    $region11: #{tpu_custom_call.1} parent=1 // pred_check_branch
      %36 = sbr.rel (0) target = $region13
    $region12: #{tpu_custom_call.1} parent=1 // pred_region
      %s38 = ssub.s32 3072, 3072
      %39 = vsyncadd [#allocation6], %s38
      %s40 = sshll.u32 [#allocation7], 4
      %s41 = int_to_ptr.vmem [resolvable:$true] %s40
      %46 = dma.hbm_to_vmem [thread:$0]  %s2, 3072, %s41, [#allocation6], 64, 64, 4
    $region13: #{tpu_custom_call.1} parent=1 // pred_fallthru
      _
    // Predicated region
    $region14: #{tpu_custom_call.1} parent=1 // pred_check
      _
    $region15: #{tpu_custom_call.1} parent=1 // pred_check_branch
      %48 = sbr.rel (0) target = $region17
    $region16: #{tpu_custom_call.1} parent=1 // pred_region
      %49 = dma.done [#allocation3], 128
    $region17: #{tpu_custom_call.1} parent=1 // pred_fallthru
      _
    // Predicated region
    $region18: #{tpu_custom_call.1} parent=1 // pred_check
      _
    $region19: #{tpu_custom_call.1} parent=1 // pred_check_branch
      %51 = sbr.rel (0) target = $region21
    $region20: #{tpu_custom_call.1} parent=1 // pred_region
      %52 = dma.done [#allocation6], 6144
    $region21: #{tpu_custom_call.1} parent=1 // pred_fallthru
      _
    // Predicated region
    $region22: #{tpu_custom_call.1} parent=1 // pred_check
      _
    $region23: #{tpu_custom_call.1} parent=1 // pred_check_branch
      %54 = sbr.rel (0) target = $region25
    $region24: #{tpu_custom_call.1} parent=1 // pred_region
      %55 = dma.done [#allocation6], 3072
    $region25: #{tpu_custom_call.1} parent=1 // pred_fallthru
      _
    %v57 = vld [vmem:[#allocation2] sm:$0xf]
    %v58 = vld [vmem:[#allocation2 + $0x4] sm:$0xf]
    %v59 = vld [vmem:[#allocation5] sm:$0xff]
    %v60 = vld [vmem:[#allocation5 + $0x8] sm:$0xff]
    %v61 = vld [vmem:[#allocation5 + $0x10] sm:$0xff]
    %v62 = vld [vmem:[#allocation5 + $0x18] sm:$0xff]
    %v63 = vld [vmem:[#allocation5 + $0x20] sm:$0xff]
    %v64 = vld [vmem:[#allocation5 + $0x28] sm:$0xff]
    %v65 = vld [vmem:[#allocation5 + $0x30] sm:$0xff]
    %v66 = vld [vmem:[#allocation5 + $0x38] sm:$0xff]
    %v67 = vld [vmem:[#allocation5 + $0x40] sm:$0xff]
    %v68 = vld [vmem:[#allocation5 + $0x48] sm:$0xff]
    %v69 = vld [vmem:[#allocation5 + $0x50] sm:$0xff]
    %v70 = vld [vmem:[#allocation5 + $0x58] sm:$0xff]
    %v71 = vld [vmem:[#allocation5 + $0x60] sm:$0xff]
    %v72 = vld [vmem:[#allocation5 + $0x68] sm:$0xff]
    %v73 = vld [vmem:[#allocation5 + $0x70] sm:$0xff]
    %v74 = vld [vmem:[#allocation5 + $0x78] sm:$0xff]
    %v75 = vld [vmem:[#allocation5 + $0x80] sm:$0xff]
    %v76 = vld [vmem:[#allocation5 + $0x88] sm:$0xff]
    %v77 = vld [vmem:[#allocation5 + $0x90] sm:$0xff]
    %v78 = vld [vmem:[#allocation5 + $0x98] sm:$0xff]
    %v79 = vld [vmem:[#allocation5 + $0xa0] sm:$0xff]
    %v80 = vld [vmem:[#allocation5 + $0xa8] sm:$0xff]
    %v81 = vld [vmem:[#allocation5 + $0xb0] sm:$0xff]
    %v82 = vld [vmem:[#allocation5 + $0xb8] sm:$0xff]
    %v83 = vld [vmem:[#allocation5 + $0xc0] sm:$0xff]
    %v84 = vld [vmem:[#allocation5 + $0xc8] sm:$0xff]
    %v85 = vld [vmem:[#allocation5 + $0xd0] sm:$0xff]
    %v86 = vld [vmem:[#allocation5 + $0xd8] sm:$0xff]
    %v87 = vld [vmem:[#allocation5 + $0xe0] sm:$0xff]
    %v88 = vld [vmem:[#allocation5 + $0xe8] sm:$0xff]
    %v89 = vld [vmem:[#allocation5 + $0xf0] sm:$0xff]
    %v90 = vld [vmem:[#allocation5 + $0xf8] sm:$0xff]
    %v91 = vld [vmem:[#allocation5 + $0x100] sm:$0xff]
    %v92 = vld [vmem:[#allocation5 + $0x108] sm:$0xff]
    %v93 = vld [vmem:[#allocation5 + $0x110] sm:$0xff]
    %v94 = vld [vmem:[#allocation5 + $0x118] sm:$0xff]
    %v95 = vld [vmem:[#allocation5 + $0x120] sm:$0xff]
    %v96 = vld [vmem:[#allocation5 + $0x128] sm:$0xff]
    %v97 = vld [vmem:[#allocation5 + $0x130] sm:$0xff]
    %v98 = vld [vmem:[#allocation5 + $0x138] sm:$0xff]
    %v99 = vld [vmem:[#allocation5 + $0x140] sm:$0xff]
    %v100 = vld [vmem:[#allocation5 + $0x148] sm:$0xff]
    %v101 = vld [vmem:[#allocation5 + $0x150] sm:$0xff]
    %v102 = vld [vmem:[#allocation5 + $0x158] sm:$0xff]
    %v103 = vld [vmem:[#allocation5 + $0x160] sm:$0xff]
    %v104 = vld [vmem:[#allocation5 + $0x168] sm:$0xff]
    %v105 = vld [vmem:[#allocation5 + $0x170] sm:$0xff]
    %v106 = vld [vmem:[#allocation5 + $0x178] sm:$0xff]
    %v109 = vunpack.c.l.b16 %v57
    %v110 = vunpack.c.l.b16 %v58
    %v111 = vpack.c.b16 %v110, %v109
    %v161 = vunpack.c.l.b16 %v59
    %v162 = vunpack.c.h.b16 %v59
    %v163 = vunpack.c.l.b16 %v60
    %v164 = vunpack.c.h.b16 %v60
    %v165 = vunpack.c.l.b16 %v61
    %v166 = vunpack.c.h.b16 %v61
    %v167 = vunpack.c.l.b16 %v62
    %v168 = vunpack.c.h.b16 %v62
    %v169 = vunpack.c.l.b16 %v63
    %v170 = vunpack.c.h.b16 %v63
    %v171 = vunpack.c.l.b16 %v64
    %v172 = vunpack.c.h.b16 %v64
    %v173 = vunpack.c.l.b16 %v65
    %v174 = vunpack.c.h.b16 %v65
    %v175 = vunpack.c.l.b16 %v66
    %v176 = vunpack.c.h.b16 %v66
    %v177 = vunpack.c.l.b16 %v67
    %v178 = vunpack.c.h.b16 %v67
    %v179 = vunpack.c.l.b16 %v68
    %v180 = vunpack.c.h.b16 %v68
    %v181 = vunpack.c.l.b16 %v69
    %v182 = vunpack.c.h.b16 %v69
    %v183 = vunpack.c.l.b16 %v70
    %v184 = vunpack.c.h.b16 %v70
    %v185 = vunpack.c.l.b16 %v71
    %v186 = vunpack.c.h.b16 %v71
    %v187 = vunpack.c.l.b16 %v72
    %v188 = vunpack.c.h.b16 %v72
    %v189 = vunpack.c.l.b16 %v73
    %v190 = vunpack.c.h.b16 %v73
    %v191 = vunpack.c.l.b16 %v74
    %v192 = vunpack.c.h.b16 %v74
    %v193 = vunpack.c.l.b16 %v75
    %v194 = vunpack.c.h.b16 %v75
    %v195 = vunpack.c.l.b16 %v76
    %v196 = vunpack.c.h.b16 %v76
    %v197 = vunpack.c.l.b16 %v77
    %v198 = vunpack.c.h.b16 %v77
    %v199 = vunpack.c.l.b16 %v78
    %v200 = vunpack.c.h.b16 %v78
    %v201 = vunpack.c.l.b16 %v79
    %v202 = vunpack.c.h.b16 %v79
    %v203 = vunpack.c.l.b16 %v80
    %v204 = vunpack.c.h.b16 %v80
    %v205 = vunpack.c.l.b16 %v81
    %v206 = vunpack.c.h.b16 %v81
    %v207 = vunpack.c.l.b16 %v82
    %v208 = vunpack.c.h.b16 %v82
    %v209 = vunpack.c.l.b16 %v83
    %v210 = vunpack.c.h.b16 %v83
    %v211 = vunpack.c.l.b16 %v84
    %v212 = vunpack.c.h.b16 %v84
    %v213 = vunpack.c.l.b16 %v85
    %v214 = vunpack.c.h.b16 %v85
    %v215 = vunpack.c.l.b16 %v86
    %v216 = vunpack.c.h.b16 %v86
    %v217 = vunpack.c.l.b16 %v87
    %v218 = vunpack.c.h.b16 %v87
    %v219 = vunpack.c.l.b16 %v88
    %v220 = vunpack.c.h.b16 %v88
    %v221 = vunpack.c.l.b16 %v89
    %v222 = vunpack.c.h.b16 %v89
    %v223 = vunpack.c.l.b16 %v90
    %v224 = vunpack.c.h.b16 %v90
    %v225 = vunpack.c.l.b16 %v91
    %v226 = vunpack.c.h.b16 %v91
    %v227 = vunpack.c.l.b16 %v92
    %v228 = vunpack.c.h.b16 %v92
    %v229 = vunpack.c.l.b16 %v93
    %v230 = vunpack.c.h.b16 %v93
    %v231 = vunpack.c.l.b16 %v94
    %v232 = vunpack.c.h.b16 %v94
    %v233 = vunpack.c.l.b16 %v95
    %v234 = vunpack.c.h.b16 %v95
    %v235 = vunpack.c.l.b16 %v96
    %v236 = vunpack.c.h.b16 %v96
    %v237 = vunpack.c.l.b16 %v97
    %v238 = vunpack.c.h.b16 %v97
    %v239 = vunpack.c.l.b16 %v98
    %v240 = vunpack.c.h.b16 %v98
    %v241 = vunpack.c.l.b16 %v99
    %v242 = vunpack.c.h.b16 %v99
    %v243 = vunpack.c.l.b16 %v100
    %v244 = vunpack.c.h.b16 %v100
    %v245 = vunpack.c.l.b16 %v101
    %v246 = vunpack.c.h.b16 %v101
    %v247 = vunpack.c.l.b16 %v102
    %v248 = vunpack.c.h.b16 %v102
    %v249 = vunpack.c.l.b16 %v103
    %v250 = vunpack.c.h.b16 %v103
    %v251 = vunpack.c.l.b16 %v104
    %v252 = vunpack.c.h.b16 %v104
    %v253 = vunpack.c.l.b16 %v105
    %v254 = vunpack.c.h.b16 %v105
    %v255 = vunpack.c.l.b16 %v106
    %v256 = vunpack.c.h.b16 %v106
    %v257 = vpack.c.b16 %v167, %v161
    %v258 = vpack.c.b16 %v168, %v162
    %v259 = vpack.c.b16 %v169, %v163
    %v260 = vpack.c.b16 %v170, %v164
    %v261 = vpack.c.b16 %v171, %v165
    %v262 = vpack.c.b16 %v172, %v166
    %v263 = vpack.c.b16 %v179, %v173
    %v264 = vpack.c.b16 %v180, %v174
    %v265 = vpack.c.b16 %v181, %v175
    %v266 = vpack.c.b16 %v182, %v176
    %v267 = vpack.c.b16 %v183, %v177
    %v268 = vpack.c.b16 %v184, %v178
    %v269 = vpack.c.b16 %v191, %v185
    %v270 = vpack.c.b16 %v192, %v186
    %v271 = vpack.c.b16 %v193, %v187
    %v272 = vpack.c.b16 %v194, %v188
    %v273 = vpack.c.b16 %v195, %v189
    %v274 = vpack.c.b16 %v196, %v190
    %v275 = vpack.c.b16 %v203, %v197
    %v276 = vpack.c.b16 %v204, %v198
    %v277 = vpack.c.b16 %v205, %v199
    %v278 = vpack.c.b16 %v206, %v200
    %v279 = vpack.c.b16 %v207, %v201
    %v280 = vpack.c.b16 %v208, %v202
    %v281 = vpack.c.b16 %v215, %v209
    %v282 = vpack.c.b16 %v216, %v210
    %v283 = vpack.c.b16 %v217, %v211
    %v284 = vpack.c.b16 %v218, %v212
    %v285 = vpack.c.b16 %v219, %v213
    %v286 = vpack.c.b16 %v220, %v214
    %v287 = vpack.c.b16 %v227, %v221
    %v288 = vpack.c.b16 %v228, %v222
    %v289 = vpack.c.b16 %v229, %v223
    %v290 = vpack.c.b16 %v230, %v224
    %v291 = vpack.c.b16 %v231, %v225
    %v292 = vpack.c.b16 %v232, %v226
    %v293 = vpack.c.b16 %v239, %v233
    %v294 = vpack.c.b16 %v240, %v234
    %v295 = vpack.c.b16 %v241, %v235
    %v296 = vpack.c.b16 %v242, %v236
    %v297 = vpack.c.b16 %v243, %v237
    %v298 = vpack.c.b16 %v244, %v238
    %v299 = vpack.c.b16 %v251, %v245
    %v300 = vpack.c.b16 %v252, %v246
    %v301 = vpack.c.b16 %v253, %v247
    %v302 = vpack.c.b16 %v254, %v248
    %v303 = vpack.c.b16 %v255, %v249
    %v304 = vpack.c.b16 %v256, %v250
    %353 = vmatprep.subr.bf16.mxu0 %v300
    %354 = vmatpush1.bf16.msra.mxu0 %v299
    %355 = vmatprep.subr.bf16.mxu0 %v294
    %356 = vmatpush1.bf16.msra.mxu0 %v293
    %357 = vmatprep.subr.bf16.mxu0 %v288
    %358 = vmatpush1.bf16.msra.mxu0 %v287
    %359 = vmatprep.subr.bf16.mxu0 %v282
    %360 = vmatpush1.bf16.msra.mxu0 %v281
    %361 = vmatprep.subr.bf16.mxu0 %v276
    %362 = vmatpush1.bf16.msra.mxu0 %v275
    %363 = vmatprep.subr.bf16.mxu0 %v270
    %364 = vmatpush1.bf16.msra.mxu0 %v269
    %365 = vmatprep.subr.bf16.mxu0 %v264
    %366 = vmatpush1.bf16.msra.mxu0 %v263
    %367 = vmatprep.subr.bf16.mxu0 %v258
    %368 = vmatpush1.bf16.msra.mxu0 %v257
    %369 = vmatprep.subr.bf16.mxu0 0
    %370 = vmatpush2.bf16.msra.mxu0 0
    %371 = vmatprep.subr.bf16.mxu0 0
    %372 = vmatpush2.bf16.msra.mxu0 0
    %373 = vmatprep.subr.bf16.mxu0 0
    %374 = vmatpush2.bf16.msra.mxu0 0
    %375 = vmatprep.subr.bf16.mxu0 0
    %376 = vmatpush2.bf16.msra.mxu0 0
    %377 = vmatprep.subr.bf16.mxu0 0
    %378 = vmatpush2.bf16.msra.mxu0 0
    %379 = vmatprep.subr.bf16.mxu0 0
    %380 = vmatpush2.bf16.msra.mxu0 0
    %381 = vmatprep.subr.bf16.mxu0 0
    %382 = vmatpush2.bf16.msra.mxu0 0
    %383 = vmatprep.subr.bf16.mxu0 0
    %384 = vmatpush2.bf16.msra.mxu0 0
    %385 = vmatprep.mubr.bf16.mxu0 0
    %386 = vmatmul.mubr.bf16.gmra.mxu0 %v111
    %v387 = vpop.f32.mrf.mxu0
    %v388 = vadd.f32 0.0, %v387
    %v389 = vpop.f32.mrf.mxu0
    %v390 = vadd.f32 0.0, %v389
    %v391 = vpop.f32.mrf.mxu0
    %v392 = vadd.f32 0.0, %v391
    %v393 = vpop.f32.mrf.mxu0
    %v394 = vadd.f32 0.0, %v393
    %395 = vdwg.mxu0
    %396 = vmatprep.subr.bf16.mxu0 %v302
    %397 = vmatpush1.bf16.msra.mxu0 %v301
    %398 = vmatprep.subr.bf16.mxu0 %v296
    %399 = vmatpush1.bf16.msra.mxu0 %v295
    %400 = vmatprep.subr.bf16.mxu0 %v290
    %401 = vmatpush1.bf16.msra.mxu0 %v289
    %402 = vmatprep.subr.bf16.mxu0 %v284
    %403 = vmatpush1.bf16.msra.mxu0 %v283
    %404 = vmatprep.subr.bf16.mxu0 %v278
    %405 = vmatpush1.bf16.msra.mxu0 %v277
    %406 = vmatprep.subr.bf16.mxu0 %v272
    %407 = vmatpush1.bf16.msra.mxu0 %v271
    %408 = vmatprep.subr.bf16.mxu0 %v266
    %409 = vmatpush1.bf16.msra.mxu0 %v265
    %410 = vmatprep.subr.bf16.mxu0 %v260
    %411 = vmatpush1.bf16.msra.mxu0 %v259
    %412 = vmatprep.subr.bf16.mxu0 0
    %413 = vmatpush2.bf16.msra.mxu0 0
    %414 = vmatprep.subr.bf16.mxu0 0
    %415 = vmatpush2.bf16.msra.mxu0 0
    %416 = vmatprep.subr.bf16.mxu0 0
    %417 = vmatpush2.bf16.msra.mxu0 0
    %418 = vmatprep.subr.bf16.mxu0 0
    %419 = vmatpush2.bf16.msra.mxu0 0
    %420 = vmatprep.subr.bf16.mxu0 0
    %421 = vmatpush2.bf16.msra.mxu0 0
    %422 = vmatprep.subr.bf16.mxu0 0
    %423 = vmatpush2.bf16.msra.mxu0 0
    %424 = vmatprep.subr.bf16.mxu0 0
    %425 = vmatpush2.bf16.msra.mxu0 0
    %426 = vmatprep.subr.bf16.mxu0 0
    %427 = vmatpush2.bf16.msra.mxu0 0
    %428 = vmatprep.mubr.bf16.mxu0 0
    %429 = vmatmul.mubr.bf16.gmra.mxu0 %v111
    %v430 = vpop.f32.mrf.mxu0
    %v431 = vadd.f32 0.0, %v430
    %v432 = vpop.f32.mrf.mxu0
    %v433 = vadd.f32 0.0, %v432
    %v434 = vpop.f32.mrf.mxu0
    %v435 = vadd.f32 0.0, %v434
    %v436 = vpop.f32.mrf.mxu0
    %v437 = vadd.f32 0.0, %v436
    %438 = vdwg.mxu0
    %439 = vmatprep.subr.bf16.mxu0 %v304
    %440 = vmatpush1.bf16.msra.mxu0 %v303
    %441 = vmatprep.subr.bf16.mxu0 %v298
    %442 = vmatpush1.bf16.msra.mxu0 %v297
    %443 = vmatprep.subr.bf16.mxu0 %v292
    %444 = vmatpush1.bf16.msra.mxu0 %v291
    %445 = vmatprep.subr.bf16.mxu0 %v286
    %446 = vmatpush1.bf16.msra.mxu0 %v285
    %447 = vmatprep.subr.bf16.mxu0 %v280
    %448 = vmatpush1.bf16.msra.mxu0 %v279
    %449 = vmatprep.subr.bf16.mxu0 %v274
    %450 = vmatpush1.bf16.msra.mxu0 %v273
    %451 = vmatprep.subr.bf16.mxu0 %v268
    %452 = vmatpush1.bf16.msra.mxu0 %v267
    %453 = vmatprep.subr.bf16.mxu0 %v262
    %454 = vmatpush1.bf16.msra.mxu0 %v261
    %455 = vmatprep.subr.bf16.mxu0 0
    %456 = vmatpush2.bf16.msra.mxu0 0
    %457 = vmatprep.subr.bf16.mxu0 0
    %458 = vmatpush2.bf16.msra.mxu0 0
    %459 = vmatprep.subr.bf16.mxu0 0
    %460 = vmatpush2.bf16.msra.mxu0 0
    %461 = vmatprep.subr.bf16.mxu0 0
    %462 = vmatpush2.bf16.msra.mxu0 0
    %463 = vmatprep.subr.bf16.mxu0 0
    %464 = vmatpush2.bf16.msra.mxu0 0
    %465 = vmatprep.subr.bf16.mxu0 0
    %466 = vmatpush2.bf16.msra.mxu0 0
    %467 = vmatprep.subr.bf16.mxu0 0
    %468 = vmatpush2.bf16.msra.mxu0 0
    %469 = vmatprep.subr.bf16.mxu0 0
    %470 = vmatpush2.bf16.msra.mxu0 0
    %471 = vmatprep.mubr.bf16.mxu0 0
    %472 = vmatmul.mubr.bf16.gmra.mxu0 %v111
    %v473 = vpop.f32.mrf.mxu0
    %v474 = vadd.f32 0.0, %v473
    %v475 = vpop.f32.mrf.mxu0
    %v476 = vadd.f32 0.0, %v475
    %v477 = vpop.f32.mrf.mxu0
    %v478 = vadd.f32 0.0, %v477
    %v479 = vpop.f32.mrf.mxu0
    %v480 = vadd.f32 0.0, %v479
    %481 = vdwg.mxu0
    %v482 = vxor.u32 %v433, 2147483648
    %v483 = vxor.u32 %v474, 2147483648
    %v484 = vxor.u32 %v476, 2147483648
    %v485 = vxor.u32 %v437, 2147483648
    %v486 = vxor.u32 %v478, 2147483648
    %v487 = vxor.u32 %v480, 2147483648
    %v488 = vmul.f32 %v482, 1.442695
    %v489 = vpow.pop %v488
    %v490 = vmul.f32 %v483, 1.442695
    %v491 = vpow.pop %v490
    %v492 = vmul.f32 %v484, 1.442695
    %v493 = vpow.pop %v492
    %v494 = vmul.f32 %v485, 1.442695
    %v495 = vpow.pop %v494
    %v496 = vmul.f32 %v486, 1.442695
    %v497 = vpow.pop %v496
    %v498 = vmul.f32 %v487, 1.442695
    %v499 = vpow.pop %v498
    %v500 = vadd.f32 %v489, 1.0
    %v501 = vadd.f32 %v491, 1.0
    %v502 = vadd.f32 %v493, 1.0
    %v503 = vadd.f32 %v495, 1.0
    %v504 = vadd.f32 %v497, 1.0
    %v505 = vadd.f32 %v499, 1.0
    %v506 = vrcp.pop %v500
    %v507 = vmul.f32 1.0, %v506
    %v508 = vrcp.pop %v501
    %v509 = vmul.f32 1.0, %v508
    %v510 = vrcp.pop %v502
    %v511 = vmul.f32 1.0, %v510
    %v512 = vrcp.pop %v503
    %v513 = vmul.f32 1.0, %v512
    %v514 = vrcp.pop %v504
    %v515 = vmul.f32 1.0, %v514
    %v516 = vrcp.pop %v505
    %v517 = vmul.f32 1.0, %v516
    %v518 = vmul.f32 %v433, %v507
    %v519 = vmul.f32 %v474, %v509
    %v520 = vmul.f32 %v476, %v511
    %v521 = vmul.f32 %v437, %v513
    %v522 = vmul.f32 %v478, %v515
    %v523 = vmul.f32 %v480, %v517
    %v524 = vmul.f32 %v388, %v518
    %v525 = vmul.f32 %v390, %v519
    %v526 = vmul.f32 %v431, %v520
    %v527 = vmul.f32 %v392, %v521
    %v528 = vmul.f32 %v394, %v522
    %v529 = vmul.f32 %v435, %v523
    %v530 = vpack.c.bf16 %v527, %v524
    %v531 = vpack.c.bf16 %v528, %v525
    %v532 = vpack.c.bf16 %v529, %v526
    %v533 = vld [vmem:[#allocation7] sm:$0xf]
    %v534 = vld [vmem:[#allocation7 + $0x4] sm:$0xf]
    %v535 = vld [vmem:[#allocation7 + $0x8] sm:$0xf]
    %v536 = vld [vmem:[#allocation7 + $0xc] sm:$0xf]
    %v537 = vld [vmem:[#allocation7 + $0x10] sm:$0xf]
    %v538 = vld [vmem:[#allocation7 + $0x14] sm:$0xf]
    %v539 = vld [vmem:[#allocation7 + $0x18] sm:$0xf]
    %v540 = vld [vmem:[#allocation7 + $0x1c] sm:$0xf]
    %v541 = vld [vmem:[#allocation7 + $0x20] sm:$0xf]
    %v542 = vld [vmem:[#allocation7 + $0x24] sm:$0xf]
    %v543 = vld [vmem:[#allocation7 + $0x28] sm:$0xf]
    %v544 = vld [vmem:[#allocation7 + $0x2c] sm:$0xf]
    %v545 = vld [vmem:[#allocation7 + $0x30] sm:$0xf]
    %v546 = vld [vmem:[#allocation7 + $0x34] sm:$0xf]
    %v547 = vld [vmem:[#allocation7 + $0x38] sm:$0xf]
    %v548 = vld [vmem:[#allocation7 + $0x3c] sm:$0xf]
    %v549 = vld [vmem:[#allocation7 + $0x40] sm:$0xf]
    %v550 = vld [vmem:[#allocation7 + $0x44] sm:$0xf]
    %v551 = vld [vmem:[#allocation7 + $0x48] sm:$0xf]
    %v552 = vld [vmem:[#allocation7 + $0x4c] sm:$0xf]
    %v553 = vld [vmem:[#allocation7 + $0x50] sm:$0xf]
    %v554 = vld [vmem:[#allocation7 + $0x54] sm:$0xf]
    %v555 = vld [vmem:[#allocation7 + $0x58] sm:$0xf]
    %v556 = vld [vmem:[#allocation7 + $0x5c] sm:$0xf]
    %v557 = vld [vmem:[#allocation7 + $0x60] sm:$0xf]
    %v558 = vld [vmem:[#allocation7 + $0x64] sm:$0xf]
    %v559 = vld [vmem:[#allocation7 + $0x68] sm:$0xf]
    %v560 = vld [vmem:[#allocation7 + $0x6c] sm:$0xf]
    %v561 = vld [vmem:[#allocation7 + $0x70] sm:$0xf]
    %v562 = vld [vmem:[#allocation7 + $0x74] sm:$0xf]
    %v563 = vld [vmem:[#allocation7 + $0x78] sm:$0xf]
    %v564 = vld [vmem:[#allocation7 + $0x7c] sm:$0xf]
    %v565 = vld [vmem:[#allocation7 + $0x80] sm:$0xf]
    %v566 = vld [vmem:[#allocation7 + $0x84] sm:$0xf]
    %v567 = vld [vmem:[#allocation7 + $0x88] sm:$0xf]
    %v568 = vld [vmem:[#allocation7 + $0x8c] sm:$0xf]
    %v569 = vld [vmem:[#allocation7 + $0x90] sm:$0xf]
    %v570 = vld [vmem:[#allocation7 + $0x94] sm:$0xf]
    %v571 = vld [vmem:[#allocation7 + $0x98] sm:$0xf]
    %v572 = vld [vmem:[#allocation7 + $0x9c] sm:$0xf]
    %v573 = vld [vmem:[#allocation7 + $0xa0] sm:$0xf]
    %v574 = vld [vmem:[#allocation7 + $0xa4] sm:$0xf]
    %v575 = vld [vmem:[#allocation7 + $0xa8] sm:$0xf]
    %v576 = vld [vmem:[#allocation7 + $0xac] sm:$0xf]
    %v577 = vld [vmem:[#allocation7 + $0xb0] sm:$0xf]
    %v578 = vld [vmem:[#allocation7 + $0xb4] sm:$0xf]
    %v579 = vld [vmem:[#allocation7 + $0xb8] sm:$0xf]
    %v580 = vld [vmem:[#allocation7 + $0xbc] sm:$0xf]
    %v629 = vunpack.c.l.b16 %v533
    %v630 = vunpack.c.l.b16 %v534
    %v631 = vunpack.c.l.b16 %v535
    %v632 = vunpack.c.l.b16 %v536
    %v633 = vunpack.c.l.b16 %v537
    %v634 = vunpack.c.l.b16 %v538
    %v635 = vunpack.c.l.b16 %v539
    %v636 = vunpack.c.l.b16 %v540
    %v637 = vunpack.c.l.b16 %v541
    %v638 = vunpack.c.l.b16 %v542
    %v639 = vunpack.c.l.b16 %v543
    %v640 = vunpack.c.l.b16 %v544
    %v641 = vunpack.c.l.b16 %v545
    %v642 = vunpack.c.l.b16 %v546
    %v643 = vunpack.c.l.b16 %v547
    %v644 = vunpack.c.l.b16 %v548
    %v645 = vunpack.c.l.b16 %v549
    %v646 = vunpack.c.l.b16 %v550
    %v647 = vunpack.c.l.b16 %v551
    %v648 = vunpack.c.l.b16 %v552
    %v649 = vunpack.c.l.b16 %v553
    %v650 = vunpack.c.l.b16 %v554
    %v651 = vunpack.c.l.b16 %v555
    %v652 = vunpack.c.l.b16 %v556
    %v653 = vunpack.c.l.b16 %v557
    %v654 = vunpack.c.l.b16 %v558
    %v655 = vunpack.c.l.b16 %v559
    %v656 = vunpack.c.l.b16 %v560
    %v657 = vunpack.c.l.b16 %v561
    %v658 = vunpack.c.l.b16 %v562
    %v659 = vunpack.c.l.b16 %v563
    %v660 = vunpack.c.l.b16 %v564
    %v661 = vunpack.c.l.b16 %v565
    %v662 = vunpack.c.l.b16 %v566
    %v663 = vunpack.c.l.b16 %v567
    %v664 = vunpack.c.l.b16 %v568
    %v665 = vunpack.c.l.b16 %v569
    %v666 = vunpack.c.l.b16 %v570
    %v667 = vunpack.c.l.b16 %v571
    %v668 = vunpack.c.l.b16 %v572
    %v669 = vunpack.c.l.b16 %v573
    %v670 = vunpack.c.l.b16 %v574
    %v671 = vunpack.c.l.b16 %v575
    %v672 = vunpack.c.l.b16 %v576
    %v673 = vunpack.c.l.b16 %v577
    %v674 = vunpack.c.l.b16 %v578
    %v675 = vunpack.c.l.b16 %v579
    %v676 = vunpack.c.l.b16 %v580
    %v677 = vpack.c.b16 %v630, %v629
    %v678 = vpack.c.b16 %v632, %v631
    %v679 = vpack.c.b16 %v634, %v633
    %v680 = vpack.c.b16 %v636, %v635
    %v681 = vpack.c.b16 %v638, %v637
    %v682 = vpack.c.b16 %v640, %v639
    %v683 = vpack.c.b16 %v642, %v641
    %v684 = vpack.c.b16 %v644, %v643
    %v685 = vpack.c.b16 %v646, %v645
    %v686 = vpack.c.b16 %v648, %v647
    %v687 = vpack.c.b16 %v650, %v649
    %v688 = vpack.c.b16 %v652, %v651
    %v689 = vpack.c.b16 %v654, %v653
    %v690 = vpack.c.b16 %v656, %v655
    %v691 = vpack.c.b16 %v658, %v657
    %v692 = vpack.c.b16 %v660, %v659
    %v693 = vpack.c.b16 %v662, %v661
    %v694 = vpack.c.b16 %v664, %v663
    %v695 = vpack.c.b16 %v666, %v665
    %v696 = vpack.c.b16 %v668, %v667
    %v697 = vpack.c.b16 %v670, %v669
    %v698 = vpack.c.b16 %v672, %v671
    %v699 = vpack.c.b16 %v674, %v673
    %v700 = vpack.c.b16 %v676, %v675
    %725 = vmatprep.subr.bf16.mxu0 0
    %726 = vmatpush1.bf16.msra.mxu0 %v684
    %727 = vmatprep.subr.bf16.mxu0 0
    %728 = vmatpush1.bf16.msra.mxu0 %v683
    %729 = vmatprep.subr.bf16.mxu0 0
    %730 = vmatpush1.bf16.msra.mxu0 %v682
    %731 = vmatprep.subr.bf16.mxu0 0
    %732 = vmatpush1.bf16.msra.mxu0 %v681
    %733 = vmatprep.subr.bf16.mxu0 0
    %734 = vmatpush1.bf16.msra.mxu0 %v680
    %735 = vmatprep.subr.bf16.mxu0 0
    %736 = vmatpush1.bf16.msra.mxu0 %v679
    %737 = vmatprep.subr.bf16.mxu0 0
    %738 = vmatpush1.bf16.msra.mxu0 %v678
    %739 = vmatprep.subr.bf16.mxu0 0
    %740 = vmatpush1.bf16.msra.mxu0 %v677
    %741 = vmatprep.subr.bf16.mxu0 0
    %742 = vmatpush2.bf16.msra.mxu0 %v692
    %743 = vmatprep.subr.bf16.mxu0 0
    %744 = vmatpush2.bf16.msra.mxu0 %v691
    %745 = vmatprep.subr.bf16.mxu0 0
    %746 = vmatpush2.bf16.msra.mxu0 %v690
    %747 = vmatprep.subr.bf16.mxu0 0
    %748 = vmatpush2.bf16.msra.mxu0 %v689
    %749 = vmatprep.subr.bf16.mxu0 0
    %750 = vmatpush2.bf16.msra.mxu0 %v688
    %751 = vmatprep.subr.bf16.mxu0 0
    %752 = vmatpush2.bf16.msra.mxu0 %v687
    %753 = vmatprep.subr.bf16.mxu0 0
    %754 = vmatpush2.bf16.msra.mxu0 %v686
    %755 = vmatprep.subr.bf16.mxu0 0
    %756 = vmatpush2.bf16.msra.mxu0 %v685
    %757 = vmatprep.mubr.bf16.mxu0 %v531
    %758 = vmatmul.mubr.bf16.gmra.mxu0 %v530
    %v759 = vpop.f32.mrf.mxu0
    %v760 = vadd.f32 0.0, %v759
    %v761 = vpop.f32.mrf.mxu0
    %v762 = vpop.f32.mrf.mxu0
    %v763 = vadd.f32 0.0, %v762
    %v764 = vpop.f32.mrf.mxu0
    %765 = vdwg.mxu0
    %766 = vmatprep.subr.bf16.mxu0 0
    %767 = vmatpush1.bf16.msra.mxu0 %v700
    %768 = vmatprep.subr.bf16.mxu0 0
    %769 = vmatpush1.bf16.msra.mxu0 %v699
    %770 = vmatprep.subr.bf16.mxu0 0
    %771 = vmatpush1.bf16.msra.mxu0 %v698
    %772 = vmatprep.subr.bf16.mxu0 0
    %773 = vmatpush1.bf16.msra.mxu0 %v697
    %774 = vmatprep.subr.bf16.mxu0 0
    %775 = vmatpush1.bf16.msra.mxu0 %v696
    %776 = vmatprep.subr.bf16.mxu0 0
    %777 = vmatpush1.bf16.msra.mxu0 %v695
    %778 = vmatprep.subr.bf16.mxu0 0
    %779 = vmatpush1.bf16.msra.mxu0 %v694
    %780 = vmatprep.subr.bf16.mxu0 0
    %781 = vmatpush1.bf16.msra.mxu0 %v693
    %782 = vmatprep.subr.bf16.mxu0 0
    %783 = vmatpush2.bf16.msra.mxu0 0
    %784 = vmatprep.subr.bf16.mxu0 0
    %785 = vmatpush2.bf16.msra.mxu0 0
    %786 = vmatprep.subr.bf16.mxu0 0
    %787 = vmatpush2.bf16.msra.mxu0 0
    %788 = vmatprep.subr.bf16.mxu0 0
    %789 = vmatpush2.bf16.msra.mxu0 0
    %790 = vmatprep.subr.bf16.mxu0 0
    %791 = vmatpush2.bf16.msra.mxu0 0
    %792 = vmatprep.subr.bf16.mxu0 0
    %793 = vmatpush2.bf16.msra.mxu0 0
    %794 = vmatprep.subr.bf16.mxu0 0
    %795 = vmatpush2.bf16.msra.mxu0 0
    %796 = vmatprep.subr.bf16.mxu0 0
    %797 = vmatpush2.bf16.msra.mxu0 0
    %798 = vmatprep.mubr.bf16.mxu0 0
    %799 = vmatmul.mubr.bf16.gmra.mxu0 %v532
    %v800 = vpop.f32.mrf.mxu0
    %v801 = vadd.f32 %v760, %v800
    %v802 = vpop.f32.mrf.mxu0
    %v803 = vpop.f32.mrf.mxu0
    %v804 = vadd.f32 %v763, %v803
    %v805 = vpop.f32.mrf.mxu0
    %806 = vdwg.mxu0
    %807 = vst [vmem:[#allocation8] sm:$0xff] %v801
    %808 = vst [vmem:[#allocation8 + $0x8] sm:$0xff] %v804
    // Predicated region
    $region26: #{tpu_custom_call.1} parent=1 // pred_check
      _
    $region27: #{tpu_custom_call.1} parent=1 // pred_check_branch
      %810 = sbr.rel (0) target = $region29
    $region28: #{tpu_custom_call.1} parent=1 // pred_region
      %s812 = ssub.s32 256, 256
      %813 = vsyncadd [#allocation4], %s812
      %s814 = sshll.u32 [#allocation8], 4
      %s815 = int_to_ptr.vmem [resolvable:$true] %s814
      %820 = dma.vmem_to_hbm [thread:$0]  %s815, 256, %s3, [#allocation4], 128, 128, 8
    $region29: #{tpu_custom_call.1} parent=1 // pred_fallthru
      _
    // Predicated region
    $region30: #{tpu_custom_call.1} parent=1 // pred_check
      _
    $region31: #{tpu_custom_call.1} parent=1 // pred_check_branch
      %822 = sbr.rel (0) target = $region33
    $region32: #{tpu_custom_call.1} parent=1 // pred_region
      %823 = dma.done [#allocation4], 256
    $region33: #{tpu_custom_call.1} parent=1 // pred_fallthru
      _
    %824 = vsyncpa [#allocation3], 1
    %825 = vsyncpa [#allocation6], 1
    %826 = vsyncpa [#allocation4], 1

</llo_original>
